<compile_context>
chip_gen: v7x
topology: tpu7x:2x2x1
jax: 0.10.0
libtpu: 0.0.40
codegen_flags: <defaults>
</compile_context>

<pallas_src>
import jax
import jax.numpy as jnp
from jax.experimental import pallas as pl
from jax.experimental.pallas import tpu as pltpu

BATCH = 2
SEQ = 8
INPUT_SIZE = 32
HIDDEN_SIZE = 32


# ---------------------------------------------------------------------------
# Fused single-layer unidirectional LSTM kernel.
# PyTorch gate ordering (i, f, g, o).  Everything fits in VMEM at these
# shapes, so it runs as one grid point with the S=8 time loop unrolled.
#   x_ref:      [S, B, D]   (time-major so the hoisted projection is sliced
#                            on its leading axis inside the recurrence)
#   out_ref:    [B, S*H]    lane-dense output slab (reshaped in the wrapper)
#   cn_ref:     [B, H]
# ---------------------------------------------------------------------------
def lstm_kernel(x_ref, h0_ref, c0_ref, w_ih_t_ref, w_hh_t_ref, b_ref,
                out_ref, cn_ref):
    S, B, D = x_ref.shape
    H = h0_ref.shape[-1]

    # Recurrent weight stays resident in vregs for the whole loop (f32, 16 KB).
    w_hh_t = w_hh_t_ref[...]                                    # [H, 4H] f32

    # ---- Hoisted input projection: one big MXU matmul instead of S tiny ones.
    # bf16 operands, f32 accumulation; bias folded once.
    x_flat = x_ref[...].reshape(S * B, D).astype(jnp.bfloat16)  # [S*B, D]
    xw = jnp.dot(x_flat, w_ih_t_ref[...],
                 preferred_element_type=jnp.float32)            # [S*B, 4H] f32
    xw = (xw + b_ref[...]).reshape(S, B, 4 * H)                 # [S, B, 4H]

    h = h0_ref[...]                                             # [B, H] f32
    c = c0_ref[...]                                             # [B, H] f32

    hs = []
    # Static unroll is fine at S=8 (~12 live vregs << 64); switch to
    # lax.fori_loop(..., unroll=k) writing into a VMEM output scratch if SEQ
    # ever grows beyond ~16-32 (static Python for does not bound live ranges).
    for t in range(S):
        # Only the recurrent matmul remains on the serial critical path.
        # Leading-axis xw[t] is a free view (no per-step sublane selects).
        # f32 recurrence for parity with torch.nn.LSTM (bf16 error compounds).
        gates = xw[t] + jnp.dot(h, w_hh_t, preferred_element_type=jnp.float32)
        # Activations on the full [B, 4H] (=128-lane) vector: 2 EUP passes.
        sig = jax.nn.sigmoid(gates)
        tnh = jnp.tanh(gates)
        i_g = sig[:, 0:H]
        f_g = sig[:, H:2 * H]
        g_g = tnh[:, 2 * H:3 * H]
        o_g = sig[:, 3 * H:4 * H]
        # Cell/hidden state math in f32 (v5e has no bf16 VALU/EUP anyway).
        c = f_g * c + i_g * g_g
        h = o_g * jnp.tanh(c)
        hs.append(h)

    # Single lane-dense slab store: [B, S*H] = 2 x 128 lanes -> unmasked vst.
    out_ref[...] = jnp.concatenate(hs, axis=-1)                 # [B, S*H]
    cn_ref[...] = c                                             # [B, H]


# ---------------------------------------------------------------------------
# Parameter prep (done ONCE, outside the forward path): transpose weights for
# row-major MXU use, fuse the two biases.  Input-projection weight pre-cast to
# bf16; recurrent weight kept f32 for parity through the recurrence.
# ---------------------------------------------------------------------------
def prepare_lstm_params(p):
    return {
        "w_ih_t": jnp.asarray(p["w_ih"].T, jnp.bfloat16),                 # [D, 4H]
        "w_hh_t": jnp.asarray(p["w_hh"].T, jnp.float32),                  # [H, 4H]
        "b": (p["b_ih"] + p["b_hh"]).astype(jnp.float32).reshape(1, -1),  # [1, 4H]
    }


def lstm_layer_forward(x, prep, h_0=None):
    """Forward of LSTMLayer: returns (outputs, (h_n, c_n)).

    dropout=0.0 (module default) -> dropout layer is None -> identity.
    """
    B, S, _ = x.shape
    H = prep["w_hh_t"].shape[0]
    if h_0 is None:
        h0 = jnp.zeros((B, H), jnp.float32)
        c0 = jnp.zeros((B, H), jnp.float32)
    else:
        # PyTorch convention: h_0/c_0 are [num_layers*num_dirs, B, H] = [1, B, H].
        # reshape (rather than [0]) fails loudly if callers pass num_layers > 1.
        h0 = jnp.reshape(h_0[0], (B, H)).astype(jnp.float32)
        c0 = jnp.reshape(h_0[1], (B, H)).astype(jnp.float32)

    # Time-major input so the hoisted projection has a leading time axis.
    x_t = jnp.transpose(x, (1, 0, 2)).astype(jnp.float32)        # [S, B, D]

    vmem = pl.BlockSpec(memory_space=pltpu.MemorySpace.VMEM)

    out_flat, c_n = pl.pallas_call(
        lstm_kernel,
        out_shape=(
            jax.ShapeDtypeStruct((B, S * H), jnp.float32),       # lane-dense slab
            jax.ShapeDtypeStruct((B, H), jnp.float32),
        ),
        in_specs=[vmem] * 6,
        out_specs=(vmem, vmem),
    )(x_t, h0, c0, prep["w_ih_t"], prep["w_hh_t"], prep["b"])

    outputs = out_flat.reshape(B, S, H)          # metadata reshape, contiguous
    h_n = outputs[:, -1][None, :, :]             # [1, B, H]  (== last timestep)
    c_n = c_n[None, :, :]                        # [1, B, H]

    # TODO(synk): training-mode nn.Dropout RNG not implemented (dropout=0.0
    # default here, so the layer is identity).
    return outputs, (h_n, c_n)


# ---------------------------------------------------------------------------
# Pure-JAX f32 reference (same math as torch.nn.LSTM) for correctness check.
# ---------------------------------------------------------------------------
def reference(x, p, h_0=None):
    B, S, _ = x.shape
    H = p["w_hh"].shape[1]
    h = jnp.zeros((B, H), jnp.float32) if h_0 is None else h_0[0][0]
    c = jnp.zeros((B, H), jnp.float32) if h_0 is None else h_0[1][0]
    outs = []
    for t in range(S):
        gates = x[:, t] @ p["w_ih"].T + h @ p["w_hh"].T + p["b_ih"] + p["b_hh"]
        i = jax.nn.sigmoid(gates[:, :H])
        f = jax.nn.sigmoid(gates[:, H:2 * H])
        g = jnp.tanh(gates[:, 2 * H:3 * H])
        o = jax.nn.sigmoid(gates[:, 3 * H:])
        c = f * c + i * g
        h = o * jnp.tanh(c)
        outs.append(h)
    return jnp.stack(outs, axis=1), (h[None], c[None])


def init_raw_params(key):
    ks = jax.random.split(key, 4)
    H, D = HIDDEN_SIZE, INPUT_SIZE
    n = lambda k, s, sc=0.1: jax.random.normal(k, s, jnp.float32) * sc
    return {
        "w_ih": n(ks[0], (4 * H, D)),
        "w_hh": n(ks[1], (4 * H, H)),
        "b_ih": n(ks[2], (4 * H,)),
        "b_hh": n(ks[3], (4 * H,)),
    }


if __name__ == "__main__":
    key = jax.random.PRNGKey(0)
    kx, kp = jax.random.split(key)
    x = jax.random.normal(kx, (BATCH, SEQ, INPUT_SIZE), jnp.float32)

    raw = init_raw_params(kp)
    prep = prepare_lstm_params(raw)          # one-time weight prep (off the hot path)

    fwd = jax.jit(lstm_layer_forward)
    out, (h_n, c_n) = fwd(x, prep)
    jax.block_until_ready((out, h_n, c_n))

    ref_out, (ref_hn, ref_cn) = reference(x, raw)

    assert out.shape == (BATCH, SEQ, HIDDEN_SIZE)
    assert h_n.shape == (1, BATCH, HIDDEN_SIZE)
    assert c_n.shape == (1, BATCH, HIDDEN_SIZE)

    # Tolerance accounts for bf16 operands on the (one-shot) input projection;
    # the recurrence itself is f32.
    tol = dict(atol=2e-2, rtol=2e-2)
    assert jnp.allclose(out, ref_out, **tol), float(jnp.max(jnp.abs(out - ref_out)))
    assert jnp.allclose(h_n, ref_hn, **tol), float(jnp.max(jnp.abs(h_n - ref_hn)))
    assert jnp.allclose(c_n, ref_cn, **tol), float(jnp.max(jnp.abs(c_n - ref_cn)))
    print("KERNEL_OK")
</pallas_src>

<mosaic_0001>
module attributes {stable_mosaic.version = 11 : i64} {
  func.func @lstm_kernel(%arg0: memref<8x2x32xf32, #tpu.memory_space<vmem>>, %arg1: memref<2x32xf32, #tpu.memory_space<vmem>>, %arg2: memref<2x32xf32, #tpu.memory_space<vmem>>, %arg3: memref<32x128xbf16, #tpu.memory_space<vmem>>, %arg4: memref<32x128xf32, #tpu.memory_space<vmem>>, %arg5: memref<1x128xf32, #tpu.memory_space<vmem>>, %arg6: memref<2x256xf32, #tpu.memory_space<vmem>>, %arg7: memref<2x32xf32, #tpu.memory_space<vmem>>) attributes {dimension_semantics = [], scalar_prefetch = 0 : i64, scratch_operands = 0 : i64, tpu.core_type = #tpu.core_type<tc>} {
    %c0 = arith.constant 0 : index
    %c0_0 = arith.constant 0 : index
    %0 = vector.load %arg4[%c0, %c0_0] : memref<32x128xf32, #tpu.memory_space<vmem>>, vector<32x128xf32>
    %c0_1 = arith.constant 0 : index
    %c0_2 = arith.constant 0 : index
    %c0_3 = arith.constant 0 : index
    %1 = vector.load %arg0[%c0_1, %c0_2, %c0_3] : memref<8x2x32xf32, #tpu.memory_space<vmem>>, vector<8x2x32xf32>
    %2 = vector.shape_cast %1 : vector<8x2x32xf32> to vector<16x32xf32>
    %3 = arith.truncf %2 : vector<16x32xf32> to vector<16x32xbf16>
    %c0_4 = arith.constant 0 : index
    %c0_5 = arith.constant 0 : index
    %4 = vector.load %arg3[%c0_4, %c0_5] : memref<32x128xbf16, #tpu.memory_space<vmem>>, vector<32x128xbf16>
    %cst = arith.constant dense<0.000000e+00> : vector<16x128xf32>
    %5 = tpu.matmul %3, %4, %cst {dimension_numbers = #tpu.dot_dimension_numbers<[1], [0], [0], [1], [0, 0, 1, 1], [], []>} : vector<16x32xbf16>, vector<32x128xbf16>, vector<16x128xf32> -> vector<16x128xf32>
    %c0_6 = arith.constant 0 : index
    %c0_7 = arith.constant 0 : index
    %6 = vector.load %arg5[%c0_6, %c0_7] : memref<1x128xf32, #tpu.memory_space<vmem>>, vector<1x128xf32>
    %7 = vector.broadcast %6 : vector<1x128xf32> to vector<16x128xf32>
    %8 = arith.addf %5, %7 : vector<16x128xf32>
    %9 = vector.shape_cast %8 : vector<16x128xf32> to vector<8x2x128xf32>
    %c0_8 = arith.constant 0 : index
    %c0_9 = arith.constant 0 : index
    %10 = vector.load %arg1[%c0_8, %c0_9] : memref<2x32xf32, #tpu.memory_space<vmem>>, vector<2x32xf32>
    %c0_10 = arith.constant 0 : index
    %c0_11 = arith.constant 0 : index
    %11 = vector.load %arg2[%c0_10, %c0_11] : memref<2x32xf32, #tpu.memory_space<vmem>>, vector<2x32xf32>
    %12 = vector.extract_strided_slice %9 {offsets = [0, 0, 0], sizes = [1, 2, 128], strides = [1, 1, 1]} : vector<8x2x128xf32> to vector<1x2x128xf32>
    %13 = vector.shape_cast %12 : vector<1x2x128xf32> to vector<2x128xf32>
    %cst_12 = arith.constant dense<0.000000e+00> : vector<2x128xf32>
    %14 = tpu.matmul %10, %0, %cst_12 {dimension_numbers = #tpu.dot_dimension_numbers<[1], [0], [0], [1], [0, 0, 1, 1], [], []>} : vector<2x32xf32>, vector<32x128xf32>, vector<2x128xf32> -> vector<2x128xf32>
    %15 = arith.addf %13, %14 : vector<2x128xf32>
    %16 = arith.negf %15 : vector<2x128xf32>
    %17 = math.exp %16 : vector<2x128xf32>
    %cst_13 = arith.constant 1.000000e+00 : f32
    %18 = vector.broadcast %cst_13 : f32 to vector<2x128xf32>
    %19 = arith.addf %18, %17 : vector<2x128xf32>
    %20 = arith.divf %18, %19 : vector<2x128xf32>
    %21 = math.tanh %15 : vector<2x128xf32>
    %22 = vector.extract_strided_slice %20 {offsets = [0, 0], sizes = [2, 32], strides = [1, 1]} : vector<2x128xf32> to vector<2x32xf32>
    %23 = vector.extract_strided_slice %20 {offsets = [0, 32], sizes = [2, 32], strides = [1, 1]} : vector<2x128xf32> to vector<2x32xf32>
    %24 = vector.extract_strided_slice %21 {offsets = [0, 64], sizes = [2, 32], strides = [1, 1]} : vector<2x128xf32> to vector<2x32xf32>
    %25 = vector.extract_strided_slice %20 {offsets = [0, 96], sizes = [2, 32], strides = [1, 1]} : vector<2x128xf32> to vector<2x32xf32>
    %26 = arith.mulf %23, %11 : vector<2x32xf32>
    %27 = arith.mulf %22, %24 : vector<2x32xf32>
    %28 = arith.addf %26, %27 : vector<2x32xf32>
    %29 = math.tanh %28 : vector<2x32xf32>
    %30 = arith.mulf %25, %29 : vector<2x32xf32>
    %31 = vector.extract_strided_slice %9 {offsets = [1, 0, 0], sizes = [1, 2, 128], strides = [1, 1, 1]} : vector<8x2x128xf32> to vector<1x2x128xf32>
    %32 = vector.shape_cast %31 : vector<1x2x128xf32> to vector<2x128xf32>
    %cst_14 = arith.constant dense<0.000000e+00> : vector<2x128xf32>
    %33 = tpu.matmul %30, %0, %cst_14 {dimension_numbers = #tpu.dot_dimension_numbers<[1], [0], [0], [1], [0, 0, 1, 1], [], []>} : vector<2x32xf32>, vector<32x128xf32>, vector<2x128xf32> -> vector<2x128xf32>
    %34 = arith.addf %32, %33 : vector<2x128xf32>
    %35 = arith.negf %34 : vector<2x128xf32>
    %36 = math.exp %35 : vector<2x128xf32>
    %cst_15 = arith.constant 1.000000e+00 : f32
    %37 = vector.broadcast %cst_15 : f32 to vector<2x128xf32>
    %38 = arith.addf %37, %36 : vector<2x128xf32>
    %39 = arith.divf %37, %38 : vector<2x128xf32>
    %40 = math.tanh %34 : vector<2x128xf32>
    %41 = vector.extract_strided_slice %39 {offsets = [0, 0], sizes = [2, 32], strides = [1, 1]} : vector<2x128xf32> to vector<2x32xf32>
    %42 = vector.extract_strided_slice %39 {offsets = [0, 32], sizes = [2, 32], strides = [1, 1]} : vector<2x128xf32> to vector<2x32xf32>
    %43 = vector.extract_strided_slice %40 {offsets = [0, 64], sizes = [2, 32], strides = [1, 1]} : vector<2x128xf32> to vector<2x32xf32>
    %44 = vector.extract_strided_slice %39 {offsets = [0, 96], sizes = [2, 32], strides = [1, 1]} : vector<2x128xf32> to vector<2x32xf32>
    %45 = arith.mulf %42, %28 : vector<2x32xf32>
    %46 = arith.mulf %41, %43 : vector<2x32xf32>
    %47 = arith.addf %45, %46 : vector<2x32xf32>
    %48 = math.tanh %47 : vector<2x32xf32>
    %49 = arith.mulf %44, %48 : vector<2x32xf32>
    %50 = vector.extract_strided_slice %9 {offsets = [2, 0, 0], sizes = [1, 2, 128], strides = [1, 1, 1]} : vector<8x2x128xf32> to vector<1x2x128xf32>
    %51 = vector.shape_cast %50 : vector<1x2x128xf32> to vector<2x128xf32>
    %cst_16 = arith.constant dense<0.000000e+00> : vector<2x128xf32>
    %52 = tpu.matmul %49, %0, %cst_16 {dimension_numbers = #tpu.dot_dimension_numbers<[1], [0], [0], [1], [0, 0, 1, 1], [], []>} : vector<2x32xf32>, vector<32x128xf32>, vector<2x128xf32> -> vector<2x128xf32>
    %53 = arith.addf %51, %52 : vector<2x128xf32>
    %54 = arith.negf %53 : vector<2x128xf32>
    %55 = math.exp %54 : vector<2x128xf32>
    %cst_17 = arith.constant 1.000000e+00 : f32
    %56 = vector.broadcast %cst_17 : f32 to vector<2x128xf32>
    %57 = arith.addf %56, %55 : vector<2x128xf32>
    %58 = arith.divf %56, %57 : vector<2x128xf32>
    %59 = math.tanh %53 : vector<2x128xf32>
    %60 = vector.extract_strided_slice %58 {offsets = [0, 0], sizes = [2, 32], strides = [1, 1]} : vector<2x128xf32> to vector<2x32xf32>
    %61 = vector.extract_strided_slice %58 {offsets = [0, 32], sizes = [2, 32], strides = [1, 1]} : vector<2x128xf32> to vector<2x32xf32>
    %62 = vector.extract_strided_slice %59 {offsets = [0, 64], sizes = [2, 32], strides = [1, 1]} : vector<2x128xf32> to vector<2x32xf32>
    %63 = vector.extract_strided_slice %58 {offsets = [0, 96], sizes = [2, 32], strides = [1, 1]} : vector<2x128xf32> to vector<2x32xf32>
    %64 = arith.mulf %61, %47 : vector<2x32xf32>
    %65 = arith.mulf %60, %62 : vector<2x32xf32>
    %66 = arith.addf %64, %65 : vector<2x32xf32>
    %67 = math.tanh %66 : vector<2x32xf32>
    %68 = arith.mulf %63, %67 : vector<2x32xf32>
    %69 = vector.extract_strided_slice %9 {offsets = [3, 0, 0], sizes = [1, 2, 128], strides = [1, 1, 1]} : vector<8x2x128xf32> to vector<1x2x128xf32>
    %70 = vector.shape_cast %69 : vector<1x2x128xf32> to vector<2x128xf32>
    %cst_18 = arith.constant dense<0.000000e+00> : vector<2x128xf32>
    %71 = tpu.matmul %68, %0, %cst_18 {dimension_numbers = #tpu.dot_dimension_numbers<[1], [0], [0], [1], [0, 0, 1, 1], [], []>} : vector<2x32xf32>, vector<32x128xf32>, vector<2x128xf32> -> vector<2x128xf32>
    %72 = arith.addf %70, %71 : vector<2x128xf32>
    %73 = arith.negf %72 : vector<2x128xf32>
    %74 = math.exp %73 : vector<2x128xf32>
    %cst_19 = arith.constant 1.000000e+00 : f32
    %75 = vector.broadcast %cst_19 : f32 to vector<2x128xf32>
    %76 = arith.addf %75, %74 : vector<2x128xf32>
    %77 = arith.divf %75, %76 : vector<2x128xf32>
    %78 = math.tanh %72 : vector<2x128xf32>
    %79 = vector.extract_strided_slice %77 {offsets = [0, 0], sizes = [2, 32], strides = [1, 1]} : vector<2x128xf32> to vector<2x32xf32>
    %80 = vector.extract_strided_slice %77 {offsets = [0, 32], sizes = [2, 32], strides = [1, 1]} : vector<2x128xf32> to vector<2x32xf32>
    %81 = vector.extract_strided_slice %78 {offsets = [0, 64], sizes = [2, 32], strides = [1, 1]} : vector<2x128xf32> to vector<2x32xf32>
    %82 = vector.extract_strided_slice %77 {offsets = [0, 96], sizes = [2, 32], strides = [1, 1]} : vector<2x128xf32> to vector<2x32xf32>
    %83 = arith.mulf %80, %66 : vector<2x32xf32>
    %84 = arith.mulf %79, %81 : vector<2x32xf32>
    %85 = arith.addf %83, %84 : vector<2x32xf32>
    %86 = math.tanh %85 : vector<2x32xf32>
    %87 = arith.mulf %82, %86 : vector<2x32xf32>
    %88 = vector.extract_strided_slice %9 {offsets = [4, 0, 0], sizes = [1, 2, 128], strides = [1, 1, 1]} : vector<8x2x128xf32> to vector<1x2x128xf32>
    %89 = vector.shape_cast %88 : vector<1x2x128xf32> to vector<2x128xf32>
    %cst_20 = arith.constant dense<0.000000e+00> : vector<2x128xf32>
    %90 = tpu.matmul %87, %0, %cst_20 {dimension_numbers = #tpu.dot_dimension_numbers<[1], [0], [0], [1], [0, 0, 1, 1], [], []>} : vector<2x32xf32>, vector<32x128xf32>, vector<2x128xf32> -> vector<2x128xf32>
    %91 = arith.addf %89, %90 : vector<2x128xf32>
    %92 = arith.negf %91 : vector<2x128xf32>
    %93 = math.exp %92 : vector<2x128xf32>
    %cst_21 = arith.constant 1.000000e+00 : f32
    %94 = vector.broadcast %cst_21 : f32 to vector<2x128xf32>
    %95 = arith.addf %94, %93 : vector<2x128xf32>
    %96 = arith.divf %94, %95 : vector<2x128xf32>
    %97 = math.tanh %91 : vector<2x128xf32>
    %98 = vector.extract_strided_slice %96 {offsets = [0, 0], sizes = [2, 32], strides = [1, 1]} : vector<2x128xf32> to vector<2x32xf32>
    %99 = vector.extract_strided_slice %96 {offsets = [0, 32], sizes = [2, 32], strides = [1, 1]} : vector<2x128xf32> to vector<2x32xf32>
    %100 = vector.extract_strided_slice %97 {offsets = [0, 64], sizes = [2, 32], strides = [1, 1]} : vector<2x128xf32> to vector<2x32xf32>
    %101 = vector.extract_strided_slice %96 {offsets = [0, 96], sizes = [2, 32], strides = [1, 1]} : vector<2x128xf32> to vector<2x32xf32>
    %102 = arith.mulf %99, %85 : vector<2x32xf32>
    %103 = arith.mulf %98, %100 : vector<2x32xf32>
    %104 = arith.addf %102, %103 : vector<2x32xf32>
    %105 = math.tanh %104 : vector<2x32xf32>
    %106 = arith.mulf %101, %105 : vector<2x32xf32>
    %107 = vector.extract_strided_slice %9 {offsets = [5, 0, 0], sizes = [1, 2, 128], strides = [1, 1, 1]} : vector<8x2x128xf32> to vector<1x2x128xf32>
    %108 = vector.shape_cast %107 : vector<1x2x128xf32> to vector<2x128xf32>
    %cst_22 = arith.constant dense<0.000000e+00> : vector<2x128xf32>
    %109 = tpu.matmul %106, %0, %cst_22 {dimension_numbers = #tpu.dot_dimension_numbers<[1], [0], [0], [1], [0, 0, 1, 1], [], []>} : vector<2x32xf32>, vector<32x128xf32>, vector<2x128xf32> -> vector<2x128xf32>
    %110 = arith.addf %108, %109 : vector<2x128xf32>
    %111 = arith.negf %110 : vector<2x128xf32>
    %112 = math.exp %111 : vector<2x128xf32>
    %cst_23 = arith.constant 1.000000e+00 : f32
    %113 = vector.broadcast %cst_23 : f32 to vector<2x128xf32>
    %114 = arith.addf %113, %112 : vector<2x128xf32>
    %115 = arith.divf %113, %114 : vector<2x128xf32>
    %116 = math.tanh %110 : vector<2x128xf32>
    %117 = vector.extract_strided_slice %115 {offsets = [0, 0], sizes = [2, 32], strides = [1, 1]} : vector<2x128xf32> to vector<2x32xf32>
    %118 = vector.extract_strided_slice %115 {offsets = [0, 32], sizes = [2, 32], strides = [1, 1]} : vector<2x128xf32> to vector<2x32xf32>
    %119 = vector.extract_strided_slice %116 {offsets = [0, 64], sizes = [2, 32], strides = [1, 1]} : vector<2x128xf32> to vector<2x32xf32>
    %120 = vector.extract_strided_slice %115 {offsets = [0, 96], sizes = [2, 32], strides = [1, 1]} : vector<2x128xf32> to vector<2x32xf32>
    %121 = arith.mulf %118, %104 : vector<2x32xf32>
    %122 = arith.mulf %117, %119 : vector<2x32xf32>
    %123 = arith.addf %121, %122 : vector<2x32xf32>
    %124 = math.tanh %123 : vector<2x32xf32>
    %125 = arith.mulf %120, %124 : vector<2x32xf32>
    %126 = vector.extract_strided_slice %9 {offsets = [6, 0, 0], sizes = [1, 2, 128], strides = [1, 1, 1]} : vector<8x2x128xf32> to vector<1x2x128xf32>
    %127 = vector.shape_cast %126 : vector<1x2x128xf32> to vector<2x128xf32>
    %cst_24 = arith.constant dense<0.000000e+00> : vector<2x128xf32>
    %128 = tpu.matmul %125, %0, %cst_24 {dimension_numbers = #tpu.dot_dimension_numbers<[1], [0], [0], [1], [0, 0, 1, 1], [], []>} : vector<2x32xf32>, vector<32x128xf32>, vector<2x128xf32> -> vector<2x128xf32>
    %129 = arith.addf %127, %128 : vector<2x128xf32>
    %130 = arith.negf %129 : vector<2x128xf32>
    %131 = math.exp %130 : vector<2x128xf32>
    %cst_25 = arith.constant 1.000000e+00 : f32
    %132 = vector.broadcast %cst_25 : f32 to vector<2x128xf32>
    %133 = arith.addf %132, %131 : vector<2x128xf32>
    %134 = arith.divf %132, %133 : vector<2x128xf32>
    %135 = math.tanh %129 : vector<2x128xf32>
    %136 = vector.extract_strided_slice %134 {offsets = [0, 0], sizes = [2, 32], strides = [1, 1]} : vector<2x128xf32> to vector<2x32xf32>
    %137 = vector.extract_strided_slice %134 {offsets = [0, 32], sizes = [2, 32], strides = [1, 1]} : vector<2x128xf32> to vector<2x32xf32>
    %138 = vector.extract_strided_slice %135 {offsets = [0, 64], sizes = [2, 32], strides = [1, 1]} : vector<2x128xf32> to vector<2x32xf32>
    %139 = vector.extract_strided_slice %134 {offsets = [0, 96], sizes = [2, 32], strides = [1, 1]} : vector<2x128xf32> to vector<2x32xf32>
    %140 = arith.mulf %137, %123 : vector<2x32xf32>
    %141 = arith.mulf %136, %138 : vector<2x32xf32>
    %142 = arith.addf %140, %141 : vector<2x32xf32>
    %143 = math.tanh %142 : vector<2x32xf32>
    %144 = arith.mulf %139, %143 : vector<2x32xf32>
    %145 = vector.extract_strided_slice %9 {offsets = [7, 0, 0], sizes = [1, 2, 128], strides = [1, 1, 1]} : vector<8x2x128xf32> to vector<1x2x128xf32>
    %146 = vector.shape_cast %145 : vector<1x2x128xf32> to vector<2x128xf32>
    %cst_26 = arith.constant dense<0.000000e+00> : vector<2x128xf32>
    %147 = tpu.matmul %144, %0, %cst_26 {dimension_numbers = #tpu.dot_dimension_numbers<[1], [0], [0], [1], [0, 0, 1, 1], [], []>} : vector<2x32xf32>, vector<32x128xf32>, vector<2x128xf32> -> vector<2x128xf32>
    %148 = arith.addf %146, %147 : vector<2x128xf32>
    %149 = arith.negf %148 : vector<2x128xf32>
    %150 = math.exp %149 : vector<2x128xf32>
    %cst_27 = arith.constant 1.000000e+00 : f32
    %151 = vector.broadcast %cst_27 : f32 to vector<2x128xf32>
    %152 = arith.addf %151, %150 : vector<2x128xf32>
    %153 = arith.divf %151, %152 : vector<2x128xf32>
    %154 = math.tanh %148 : vector<2x128xf32>
    %155 = vector.extract_strided_slice %153 {offsets = [0, 0], sizes = [2, 32], strides = [1, 1]} : vector<2x128xf32> to vector<2x32xf32>
    %156 = vector.extract_strided_slice %153 {offsets = [0, 32], sizes = [2, 32], strides = [1, 1]} : vector<2x128xf32> to vector<2x32xf32>
    %157 = vector.extract_strided_slice %154 {offsets = [0, 64], sizes = [2, 32], strides = [1, 1]} : vector<2x128xf32> to vector<2x32xf32>
    %158 = vector.extract_strided_slice %153 {offsets = [0, 96], sizes = [2, 32], strides = [1, 1]} : vector<2x128xf32> to vector<2x32xf32>
    %159 = arith.mulf %156, %142 : vector<2x32xf32>
    %160 = arith.mulf %155, %157 : vector<2x32xf32>
    %161 = arith.addf %159, %160 : vector<2x32xf32>
    %162 = math.tanh %161 : vector<2x32xf32>
    %163 = arith.mulf %158, %162 : vector<2x32xf32>
    %164 = tpu.concatenate %30, %49, %68, %87, %106, %125, %144, %163 in 1 : vector<2x32xf32>, vector<2x32xf32>, vector<2x32xf32>, vector<2x32xf32>, vector<2x32xf32>, vector<2x32xf32>, vector<2x32xf32>, vector<2x32xf32> -> vector<2x256xf32>
    %c0_28 = arith.constant 0 : index
    %c0_29 = arith.constant 0 : index
    %165 = vector.load %arg6[%c0_28, %c0_29] : memref<2x256xf32, #tpu.memory_space<vmem>>, vector<2x256xf32>
    tpu.vector_store %arg6[%c0_28, %c0_29], %164 {strides = array<i32>} : memref<2x256xf32, #tpu.memory_space<vmem>>, vector<2x256xf32>,
    %c0_30 = arith.constant 0 : index
    %c0_31 = arith.constant 0 : index
    %166 = vector.load %arg7[%c0_30, %c0_31] : memref<2x32xf32, #tpu.memory_space<vmem>>, vector<2x32xf32>
    tpu.vector_store %arg7[%c0_30, %c0_31], %161 {strides = array<i32>} : memref<2x32xf32, #tpu.memory_space<vmem>>, vector<2x32xf32>,
    return
  }
}

</mosaic_0001>

<llo_original>
// kernel: lstm_layer_forward.1
$region0: #{lstm_layer_forward.1}
  #allocation0 [shape = 'u32[]', space=smem, size = 0x4, offset = 0x4, fixed_abs, tag = 'smem constant byte address 0x4 - core index']
  #allocation1 [shape = 'u32[144,128]{1,0:T(1,128)}', space=vmem, size = 0x12000, scoped, tag = 'internal scratch']
  %s0 = inlined_call_operand.vmem [shape: f32[8,2,32], index: 0, kind: input, shape index: {}]
  %s1 = inlined_call_operand.vmem [shape: f32[2,32], index: 1, kind: input, shape index: {}, may-alias: {1,2}]
  %s2 = inlined_call_operand.vmem [shape: f32[2,32], index: 2, kind: input, shape index: {}, may-alias: {1,2}]
  %s3 = inlined_call_operand.hbm [shape: bf16[32,128], index: 3, kind: input, shape index: {}]
  %s4 = inlined_call_operand.vmem [shape: f32[32,128], index: 4, kind: input, shape index: {}]
  %s5 = inlined_call_operand.vmem [shape: f32[1,128], index: 5, kind: input, shape index: {}]
  %s6 = inlined_call_operand.vmem [shape: f32[2,256], index: 6, kind: output, shape index: {0}]
  %s7 = inlined_call_operand.hbm [shape: f32[2,32], index: 7, kind: output, shape index: {1}]
  %8 = xla_tuple %s6, %s7
  %s9 = sld [smem:[#allocation0]]
  $region46: #{lstm_layer_forward.1} parent=0
    _
  %s11 = ssub.s32 1, %s9
  %s12 = scalar_select 0, %s11, %s9
  $region1: #{lstm_layer_forward.1} parent=0
    #allocation2 [shape = 'u8[8192]{0}', space=vmem, size = 0x2000, scoped, tag = 'input window, operand 3, single buffered']
    #allocation3 [shape = 's32[1]{0}', space=sflag, size = 0x4, scoped, tag = 'scoped memory for lstm_layer_forward.1']
    #allocation4 [shape = 's32[1]{0}', space=sflag, size = 0x4, scoped, tag = 'scoped memory for lstm_layer_forward.1']
    #allocation5 [shape = 'u8[1024]{0}', space=vmem, size = 0x400, scoped, tag = 'output window, operand 1, single buffered']
    %13 = vsyncpa [#allocation3], 0
    %14 = vsyncpa [#allocation4], 0
    // Predicated region
    $region2: #{lstm_layer_forward.1} parent=1 // pred_check
      _
    $region3: #{lstm_layer_forward.1} parent=1 // pred_check_branch
      %16 = sbr.rel (0) target = $region5
    $region4: #{lstm_layer_forward.1} parent=1 // pred_region
      _
    $region5: #{lstm_layer_forward.1} parent=1 // pred_fallthru
      _
    // Predicated region
    $region6: #{lstm_layer_forward.1} parent=1 // pred_check
      _
    $region7: #{lstm_layer_forward.1} parent=1 // pred_check_branch
      %18 = sbr.rel (0) target = $region9
    $region8: #{lstm_layer_forward.1} parent=1 // pred_region
      _
    $region9: #{lstm_layer_forward.1} parent=1 // pred_fallthru
      _
    // Predicated region
    $region10: #{lstm_layer_forward.1} parent=1 // pred_check
      _
    $region11: #{lstm_layer_forward.1} parent=1 // pred_check_branch
      %20 = sbr.rel (0) target = $region13
    $region12: #{lstm_layer_forward.1} parent=1 // pred_region
      _
    $region13: #{lstm_layer_forward.1} parent=1 // pred_fallthru
      _
    // Predicated region
    $region14: #{lstm_layer_forward.1} parent=1 // pred_check
      _
    $region15: #{lstm_layer_forward.1} parent=1 // pred_check_branch
      %22 = sbr.rel (0) target = $region17
    $region16: #{lstm_layer_forward.1} parent=1 // pred_region
      %s24 = ssub.s32 256, 256
      %25 = vsyncadd [#allocation3], %s24
      %s26 = sshll.u32 [#allocation2], 4
      %s27 = int_to_ptr.vmem [resolvable:$true] %s26
      %32 = dma.hbm_to_vmem [thread:$0]  %s3, 256, %s27, [#allocation3], 64, 64, 4
    $region17: #{lstm_layer_forward.1} parent=1 // pred_fallthru
      _
    // Predicated region
    $region18: #{lstm_layer_forward.1} parent=1 // pred_check
      _
    $region19: #{lstm_layer_forward.1} parent=1 // pred_check_branch
      %34 = sbr.rel (0) target = $region21
    $region20: #{lstm_layer_forward.1} parent=1 // pred_region
      _
    $region21: #{lstm_layer_forward.1} parent=1 // pred_fallthru
      _
    // Predicated region
    $region22: #{lstm_layer_forward.1} parent=1 // pred_check
      _
    $region23: #{lstm_layer_forward.1} parent=1 // pred_check_branch
      %36 = sbr.rel (0) target = $region25
    $region24: #{lstm_layer_forward.1} parent=1 // pred_region
      _
    $region25: #{lstm_layer_forward.1} parent=1 // pred_fallthru
      _
    // Predicated region
    $region26: #{lstm_layer_forward.1} parent=1 // pred_check
      _
    $region27: #{lstm_layer_forward.1} parent=1 // pred_check_branch
      %38 = sbr.rel (0) target = $region29
    $region28: #{lstm_layer_forward.1} parent=1 // pred_region
      %39 = dma.done [#allocation3], 256
    $region29: #{lstm_layer_forward.1} parent=1 // pred_fallthru
      _
    %v41 = vld [vmem:[%s4] sm:$0xff]
    %v42 = vld [vmem:[%s4 + $0x8] sm:$0xff]
    %v43 = vld [vmem:[%s4 + $0x10] sm:$0xff]
    %v44 = vld [vmem:[%s4 + $0x18] sm:$0xff]
    %v45 = vld [vmem:[%s0] sm:$0x3]
    %v46 = vld [vmem:[%s0 + $0x2] sm:$0x3]
    %v47 = vld [vmem:[%s0 + $0x4] sm:$0x3]
    %v48 = vld [vmem:[%s0 + $0x6] sm:$0x3]
    %v49 = vld [vmem:[%s0 + $0x8] sm:$0x3]
    %v50 = vld [vmem:[%s0 + $0xa] sm:$0x3]
    %v51 = vld [vmem:[%s0 + $0xc] sm:$0x3]
    %v52 = vld [vmem:[%s0 + $0xe] sm:$0x3]
    %v61 = vcombine.low %v45, %v46
    %v62 = vcombine.low %v47, %v48
    %v64 = vunpack.c.l.s4 1983009808
    %v65 = vunpack.c.0.s8 %v64
    %v66 = vlaneseq
    %v67 = vshrl.u32 %v66, 7
    %v68 = vsub.s32 %v65, %v67
    %v69 = vrot.slane %v61, %v68
    %v71 = vunpack.c.l.s4 1983009808
    %v72 = vunpack.c.0.s8 %v71
    %v73 = vlaneseq
    %v74 = vshrl.u32 %v73, 7
    %v75 = vsub.s32 %v72, %v74
    %v76 = vrot.slane %v62, %v75
    %v77 = vcombine.low %v69, %v76
    %v78 = vcombine.low %v49, %v50
    %v79 = vcombine.low %v51, %v52
    %v81 = vunpack.c.l.s4 1983009808
    %v82 = vunpack.c.0.s8 %v81
    %v83 = vlaneseq
    %v84 = vshrl.u32 %v83, 7
    %v85 = vsub.s32 %v82, %v84
    %v86 = vrot.slane %v78, %v85
    %v88 = vunpack.c.l.s4 1983009808
    %v89 = vunpack.c.0.s8 %v88
    %v90 = vlaneseq
    %v91 = vshrl.u32 %v90, 7
    %v92 = vsub.s32 %v89, %v91
    %v93 = vrot.slane %v79, %v92
    %v94 = vcombine.low %v86, %v93
    %v97 = vpack.c.bf16 %v94, %v77
    %v98 = vld [vmem:[#allocation2] sm:$0xf]
    %v99 = vld [vmem:[#allocation2 + $0x4] sm:$0xf]
    %v100 = vld [vmem:[#allocation2 + $0x8] sm:$0xf]
    %v101 = vld [vmem:[#allocation2 + $0xc] sm:$0xf]
    %v102 = vld [vmem:[%s5] sm:$0x1]
    %v104 = vlaneseq
    %v105 = vshrl.u32 %v104, 7
    %v106 = vsub.s32 0, %v105
    %v107 = vrot.slane %v102, %v106
    %v113 = vunpack.c.l.b16 %v98
    %v114 = vunpack.c.l.b16 %v99
    %v115 = vunpack.c.l.b16 %v100
    %v116 = vunpack.c.l.b16 %v101
    %v117 = vpack.c.b16 %v114, %v113
    %v118 = vpack.c.b16 %v116, %v115
    %vm121 = vcmask 261120
    %v123 = vsel %vm121, %v97, 0
    %125 = vmatprep.subr.bf16.mxu0 0
    %126 = vmatpush1.bf16.msra.mxu0 %v117
    %127 = vmatprep.subr.bf16.mxu0 0
    %128 = vmatpush1.bf16.msra.mxu0 %v118
    %129 = vmatprep.subr.bf16.mxu0 0
    %130 = vmatpush1.bf16.msra.mxu0 0
    %131 = vmatprep.subr.bf16.mxu0 0
    %132 = vmatpush1.bf16.msra.mxu0 0
    %133 = vmatprep.subr.bf16.mxu0 0
    %134 = vmatpush1.bf16.msra.mxu0 0
    %135 = vmatprep.subr.bf16.mxu0 0
    %136 = vmatpush1.bf16.msra.mxu0 0
    %137 = vmatprep.subr.bf16.mxu0 0
    %138 = vmatpush1.bf16.msra.mxu0 0
    %139 = vmatprep.subr.bf16.mxu0 0
    %140 = vmatpush1.bf16.msra.mxu0 0
    %141 = vmatprep.subr.bf16.mxu0 0
    %142 = vmatpush1.bf16.msra.mxu0 0
    %143 = vmatprep.subr.bf16.mxu0 0
    %144 = vmatpush1.bf16.msra.mxu0 0
    %145 = vmatprep.subr.bf16.mxu0 0
    %146 = vmatpush1.bf16.msra.mxu0 0
    %147 = vmatprep.subr.bf16.mxu0 0
    %148 = vmatpush1.bf16.msra.mxu0 0
    %149 = vmatprep.subr.bf16.mxu0 0
    %150 = vmatpush1.bf16.msra.mxu0 0
    %151 = vmatprep.subr.bf16.mxu0 0
    %152 = vmatpush1.bf16.msra.mxu0 0
    %153 = vmatprep.subr.bf16.mxu0 0
    %154 = vmatpush1.bf16.msra.mxu0 0
    %155 = vmatprep.subr.bf16.mxu0 0
    %156 = vmatpush1.bf16.msra.mxu0 0
    %157 = vmatprep.mubr.bf16.mxu0 0
    %158 = vmatmul.mubr.bf16.gmra.mrb[0].mxu0 %v123
    %v159 = vpop.f32.mrb[0].mxu0
    %v160 = vadd.f32 %v107, %v159
    %v161 = vpop.f32.mrb[0].mxu0
    %v162 = vpop.f32.mrb[0].mxu0
    %v163 = vadd.f32 %v107, %v162
    %v164 = vpop.f32.mrb[0].mxu0
    %165 = vdwg.mxu0
    %v168 = vcombine.high %v160, %v160
    %v170 = vunpack.c.l.s4 1983009808
    %v171 = vunpack.c.0.s8 %v170
    %v172 = vlaneseq
    %v173 = vshrl.u32 %v172, 7
    %v174 = vsub.s32 %v171, %v173
    %v175 = vrot.slane %v160, %v174
    %v177 = vunpack.c.l.s4 1983009808
    %v178 = vunpack.c.0.s8 %v177
    %v179 = vlaneseq
    %v180 = vshrl.u32 %v179, 7
    %v181 = vsub.s32 %v178, %v180
    %v182 = vrot.slane %v168, %v181
    %v183 = vcombine.high %v175, %v175
    %v184 = vcombine.high %v182, %v182
    %v185 = vcombine.high %v163, %v163
    %v187 = vunpack.c.l.s4 1983009808
    %v188 = vunpack.c.0.s8 %v187
    %v189 = vlaneseq
    %v190 = vshrl.u32 %v189, 7
    %v191 = vsub.s32 %v188, %v190
    %v192 = vrot.slane %v163, %v191
    %v194 = vunpack.c.l.s4 1983009808
    %v195 = vunpack.c.0.s8 %v194
    %v196 = vlaneseq
    %v197 = vshrl.u32 %v196, 7
    %v198 = vsub.s32 %v195, %v197
    %v199 = vrot.slane %v185, %v198
    %v200 = vcombine.high %v192, %v192
    %v201 = vcombine.high %v199, %v199
    %v210 = vld [vmem:[%s1] sm:$0x3]
    %v211 = vld [vmem:[%s2] sm:$0x3]
    %v213 = vsel %vm121, %v210, 0
    %215 = vmatprep.subr.mxu0 0.0
    %216 = vmatpush1.msra.mxu0 %v41
    %217 = vmatprep.subr.mxu0 0.0
    %218 = vmatpush1.msra.mxu0 %v42
    %219 = vmatprep.subr.mxu0 0.0
    %220 = vmatpush1.msra.mxu0 %v43
    %221 = vmatprep.subr.mxu0 0.0
    %222 = vmatpush1.msra.mxu0 %v44
    %223 = vmatprep.subr.mxu0 0.0
    %224 = vmatpush1.msra.mxu0 0.0
    %225 = vmatprep.subr.mxu0 0.0
    %226 = vmatpush1.msra.mxu0 0.0
    %227 = vmatprep.subr.mxu0 0.0
    %228 = vmatpush1.msra.mxu0 0.0
    %229 = vmatprep.subr.mxu0 0.0
    %230 = vmatpush1.msra.mxu0 0.0
    %231 = vmatprep.subr.mxu0 0.0
    %232 = vmatpush1.msra.mxu0 0.0
    %233 = vmatprep.subr.mxu0 0.0
    %234 = vmatpush1.msra.mxu0 0.0
    %235 = vmatprep.subr.mxu0 0.0
    %236 = vmatpush1.msra.mxu0 0.0
    %237 = vmatprep.subr.mxu0 0.0
    %238 = vmatpush1.msra.mxu0 0.0
    %239 = vmatprep.subr.mxu0 0.0
    %240 = vmatpush1.msra.mxu0 0.0
    %241 = vmatprep.subr.mxu0 0.0
    %242 = vmatpush1.msra.mxu0 0.0
    %243 = vmatprep.subr.mxu0 0.0
    %244 = vmatpush1.msra.mxu0 0.0
    %245 = vmatprep.subr.mxu0 0.0
    %246 = vmatpush1.msra.mxu0 0.0
    %247 = vmatprep.subr.mxu0 0.0
    %248 = vmatpush1.msra.mxu0 0.0
    %249 = vmatprep.subr.mxu0 0.0
    %250 = vmatpush1.msra.mxu0 0.0
    %251 = vmatprep.subr.mxu0 0.0
    %252 = vmatpush1.msra.mxu0 0.0
    %253 = vmatprep.subr.mxu0 0.0
    %254 = vmatpush1.msra.mxu0 0.0
    %255 = vmatprep.subr.mxu0 0.0
    %256 = vmatpush1.msra.mxu0 0.0
    %257 = vmatprep.subr.mxu0 0.0
    %258 = vmatpush1.msra.mxu0 0.0
    %259 = vmatprep.subr.mxu0 0.0
    %260 = vmatpush1.msra.mxu0 0.0
    %261 = vmatprep.subr.mxu0 0.0
    %262 = vmatpush1.msra.mxu0 0.0
    %263 = vmatprep.subr.mxu0 0.0
    %264 = vmatpush1.msra.mxu0 0.0
    %265 = vmatprep.subr.mxu0 0.0
    %266 = vmatpush1.msra.mxu0 0.0
    %267 = vmatprep.subr.mxu0 0.0
    %268 = vmatpush1.msra.mxu0 0.0
    %269 = vmatprep.subr.mxu0 0.0
    %270 = vmatpush1.msra.mxu0 0.0
    %271 = vmatprep.subr.mxu0 0.0
    %272 = vmatpush1.msra.mxu0 0.0
    %273 = vmatprep.subr.mxu0 0.0
    %274 = vmatpush1.msra.mxu0 0.0
    %275 = vmatprep.subr.mxu0 0.0
    %276 = vmatpush1.msra.mxu0 0.0
    %277 = vmatprep.subr.mxu0 0.0
    %278 = vmatpush1.msra.mxu0 0.0
    %279 = vmatprep.mubr.f32.mxu0 0.0
    %280 = vmatmul.mubr.f32.gmra.mrb[0].mxu0 %v213
    %v281 = vpop.f32.mrb[0].mxu0
    %v282 = vadd.f32 0.0, %v281
    %v283 = vpop.f32.mrb[0].mxu0
    %284 = vdwg.mxu0
    %v285 = vadd.f32 %v175, %v282
    %v286 = vxor.u32 %v285, 2147483648
    %v287 = vmul.f32 %v286, 1.442695
    %v288 = vpow.pop %v287
    %v289 = vadd.f32 %v288, 1.0
    %v290 = vrcp.pop %v289
    %v291 = vmul.f32 1.0, %v290
    %v292 = vtanh.pop %v285
    %v295 = vunpack.c.l.s4 1983009808
    %v296 = vunpack.c.0.s8 %v295
    %v297 = vlaneseq
    %v298 = vshrl.u32 %v297, 7
    %v299 = vsub.s32 %v296, %v298
    %v300 = vrot.slane %v211, %v299
    %301 = vrot.lane.b32.xlu0 %v300, 32
    %v302 = vpop.permute.xlu0 %301
    %v304 = vmul.f32 %v291, %v302
    %306 = vrot.lane.b32.xlu0 %v292, 64
    %v307 = vpop.permute.xlu0 %306
    %v309 = vmul.f32 %v291, %v307
    %311 = vrot.lane.b32.xlu0 %v309, 32
    %v312 = vpop.permute.xlu0 %311
    %v314 = vadd.f32 %v304, %v312
    %v315 = vtanh.pop %v314
    %317 = vrot.lane.b32.xlu0 %v315, 64
    %v318 = vpop.permute.xlu0 %317
    %v320 = vmul.f32 %v291, %v318
    %v323 = vunpack.c.l.s4 1983009808
    %v324 = vunpack.c.0.s8 %v323
    %v325 = vlaneseq
    %v326 = vshrl.u32 %v325, 7
    %v327 = vsub.s32 %v324, %v326
    %v328 = vrot.slane %v320, %v327
    %329 = vrot.lane.b32.xlu0 %v328, 32
    %v330 = vpop.permute.xlu0 %329
    %v331 = vsel %vm121, %v330, 0
    %333 = vmatprep.subr.mxu0 0.0
    %334 = vmatpush1.msra.mxu0 %v41
    %335 = vmatprep.subr.mxu0 0.0
    %336 = vmatpush1.msra.mxu0 %v42
    %337 = vmatprep.subr.mxu0 0.0
    %338 = vmatpush1.msra.mxu0 %v43
    %339 = vmatprep.subr.mxu0 0.0
    %340 = vmatpush1.msra.mxu0 %v44
    %341 = vmatprep.subr.mxu0 0.0
    %342 = vmatpush1.msra.mxu0 0.0
    %343 = vmatprep.subr.mxu0 0.0
    %344 = vmatpush1.msra.mxu0 0.0
    %345 = vmatprep.subr.mxu0 0.0
    %346 = vmatpush1.msra.mxu0 0.0
    %347 = vmatprep.subr.mxu0 0.0
    %348 = vmatpush1.msra.mxu0 0.0
    %349 = vmatprep.subr.mxu0 0.0
    %350 = vmatpush1.msra.mxu0 0.0
    %351 = vmatprep.subr.mxu0 0.0
    %352 = vmatpush1.msra.mxu0 0.0
    %353 = vmatprep.subr.mxu0 0.0
    %354 = vmatpush1.msra.mxu0 0.0
    %355 = vmatprep.subr.mxu0 0.0
    %356 = vmatpush1.msra.mxu0 0.0
    %357 = vmatprep.subr.mxu0 0.0
    %358 = vmatpush1.msra.mxu0 0.0
    %359 = vmatprep.subr.mxu0 0.0
    %360 = vmatpush1.msra.mxu0 0.0
    %361 = vmatprep.subr.mxu0 0.0
    %362 = vmatpush1.msra.mxu0 0.0
    %363 = vmatprep.subr.mxu0 0.0
    %364 = vmatpush1.msra.mxu0 0.0
    %365 = vmatprep.subr.mxu0 0.0
    %366 = vmatpush1.msra.mxu0 0.0
    %367 = vmatprep.subr.mxu0 0.0
    %368 = vmatpush1.msra.mxu0 0.0
    %369 = vmatprep.subr.mxu0 0.0
    %370 = vmatpush1.msra.mxu0 0.0
    %371 = vmatprep.subr.mxu0 0.0
    %372 = vmatpush1.msra.mxu0 0.0
    %373 = vmatprep.subr.mxu0 0.0
    %374 = vmatpush1.msra.mxu0 0.0
    %375 = vmatprep.subr.mxu0 0.0
    %376 = vmatpush1.msra.mxu0 0.0
    %377 = vmatprep.subr.mxu0 0.0
    %378 = vmatpush1.msra.mxu0 0.0
    %379 = vmatprep.subr.mxu0 0.0
    %380 = vmatpush1.msra.mxu0 0.0
    %381 = vmatprep.subr.mxu0 0.0
    %382 = vmatpush1.msra.mxu0 0.0
    %383 = vmatprep.subr.mxu0 0.0
    %384 = vmatpush1.msra.mxu0 0.0
    %385 = vmatprep.subr.mxu0 0.0
    %386 = vmatpush1.msra.mxu0 0.0
    %387 = vmatprep.subr.mxu0 0.0
    %388 = vmatpush1.msra.mxu0 0.0
    %389 = vmatprep.subr.mxu0 0.0
    %390 = vmatpush1.msra.mxu0 0.0
    %391 = vmatprep.subr.mxu0 0.0
    %392 = vmatpush1.msra.mxu0 0.0
    %393 = vmatprep.subr.mxu0 0.0
    %394 = vmatpush1.msra.mxu0 0.0
    %395 = vmatprep.subr.mxu0 0.0
    %396 = vmatpush1.msra.mxu0 0.0
    %397 = vmatprep.mubr.f32.mxu0 0.0
    %398 = vmatmul.mubr.f32.gmra.mrb[0].mxu0 %v331
    %v399 = vpop.f32.mrb[0].mxu0
    %v400 = vadd.f32 0.0, %v399
    %v401 = vpop.f32.mrb[0].mxu0
    %402 = vdwg.mxu0
    %v403 = vadd.f32 %v183, %v400
    %v404 = vxor.u32 %v403, 2147483648
    %v405 = vmul.f32 %v404, 1.442695
    %v406 = vpow.pop %v405
    %v407 = vadd.f32 %v406, 1.0
    %v408 = vrcp.pop %v407
    %v409 = vmul.f32 1.0, %v408
    %v410 = vtanh.pop %v403
    %v411 = vmul.f32 %v409, %v314
    %413 = vrot.lane.b32.xlu0 %v410, 64
    %v414 = vpop.permute.xlu0 %413
    %v416 = vmul.f32 %v409, %v414
    %418 = vrot.lane.b32.xlu0 %v416, 32
    %v419 = vpop.permute.xlu0 %418
    %v421 = vadd.f32 %v411, %v419
    %v422 = vtanh.pop %v421
    %424 = vrot.lane.b32.xlu0 %v422, 64
    %v425 = vpop.permute.xlu0 %424
    %v427 = vmul.f32 %v409, %v425
    %v430 = vunpack.c.l.s4 1983009808
    %v431 = vunpack.c.0.s8 %v430
    %v432 = vlaneseq
    %v433 = vshrl.u32 %v432, 7
    %v434 = vsub.s32 %v431, %v433
    %v435 = vrot.slane %v427, %v434
    %436 = vrot.lane.b32.xlu0 %v435, 32
    %v437 = vpop.permute.xlu0 %436
    %v438 = vsel %vm121, %v437, 0
    %440 = vmatprep.subr.mxu0 0.0
    %441 = vmatpush1.msra.mxu0 %v41
    %442 = vmatprep.subr.mxu0 0.0
    %443 = vmatpush1.msra.mxu0 %v42
    %444 = vmatprep.subr.mxu0 0.0
    %445 = vmatpush1.msra.mxu0 %v43
    %446 = vmatprep.subr.mxu0 0.0
    %447 = vmatpush1.msra.mxu0 %v44
    %448 = vmatprep.subr.mxu0 0.0
    %449 = vmatpush1.msra.mxu0 0.0
    %450 = vmatprep.subr.mxu0 0.0
    %451 = vmatpush1.msra.mxu0 0.0
    %452 = vmatprep.subr.mxu0 0.0
    %453 = vmatpush1.msra.mxu0 0.0
    %454 = vmatprep.subr.mxu0 0.0
    %455 = vmatpush1.msra.mxu0 0.0
    %456 = vmatprep.subr.mxu0 0.0
    %457 = vmatpush1.msra.mxu0 0.0
    %458 = vmatprep.subr.mxu0 0.0
    %459 = vmatpush1.msra.mxu0 0.0
    %460 = vmatprep.subr.mxu0 0.0
    %461 = vmatpush1.msra.mxu0 0.0
    %462 = vmatprep.subr.mxu0 0.0
    %463 = vmatpush1.msra.mxu0 0.0
    %464 = vmatprep.subr.mxu0 0.0
    %465 = vmatpush1.msra.mxu0 0.0
    %466 = vmatprep.subr.mxu0 0.0
    %467 = vmatpush1.msra.mxu0 0.0
    %468 = vmatprep.subr.mxu0 0.0
    %469 = vmatpush1.msra.mxu0 0.0
    %470 = vmatprep.subr.mxu0 0.0
    %471 = vmatpush1.msra.mxu0 0.0
    %472 = vmatprep.subr.mxu0 0.0
    %473 = vmatpush1.msra.mxu0 0.0
    %474 = vmatprep.subr.mxu0 0.0
    %475 = vmatpush1.msra.mxu0 0.0
    %476 = vmatprep.subr.mxu0 0.0
    %477 = vmatpush1.msra.mxu0 0.0
    %478 = vmatprep.subr.mxu0 0.0
    %479 = vmatpush1.msra.mxu0 0.0
    %480 = vmatprep.subr.mxu0 0.0
    %481 = vmatpush1.msra.mxu0 0.0
    %482 = vmatprep.subr.mxu0 0.0
    %483 = vmatpush1.msra.mxu0 0.0
    %484 = vmatprep.subr.mxu0 0.0
    %485 = vmatpush1.msra.mxu0 0.0
    %486 = vmatprep.subr.mxu0 0.0
    %487 = vmatpush1.msra.mxu0 0.0
    %488 = vmatprep.subr.mxu0 0.0
    %489 = vmatpush1.msra.mxu0 0.0
    %490 = vmatprep.subr.mxu0 0.0
    %491 = vmatpush1.msra.mxu0 0.0
    %492 = vmatprep.subr.mxu0 0.0
    %493 = vmatpush1.msra.mxu0 0.0
    %494 = vmatprep.subr.mxu0 0.0
    %495 = vmatpush1.msra.mxu0 0.0
    %496 = vmatprep.subr.mxu0 0.0
    %497 = vmatpush1.msra.mxu0 0.0
    %498 = vmatprep.subr.mxu0 0.0
    %499 = vmatpush1.msra.mxu0 0.0
    %500 = vmatprep.subr.mxu0 0.0
    %501 = vmatpush1.msra.mxu0 0.0
    %502 = vmatprep.subr.mxu0 0.0
    %503 = vmatpush1.msra.mxu0 0.0
    %504 = vmatprep.mubr.f32.mxu0 0.0
    %505 = vmatmul.mubr.f32.gmra.mrb[0].mxu0 %v438
    %v506 = vpop.f32.mrb[0].mxu0
    %v507 = vadd.f32 0.0, %v506
    %v508 = vpop.f32.mrb[0].mxu0
    %509 = vdwg.mxu0
    %v510 = vadd.f32 %v182, %v507
    %v511 = vxor.u32 %v510, 2147483648
    %v512 = vmul.f32 %v511, 1.442695
    %v513 = vpow.pop %v512
    %v514 = vadd.f32 %v513, 1.0
    %v515 = vrcp.pop %v514
    %v516 = vmul.f32 1.0, %v515
    %v517 = vtanh.pop %v510
    %v518 = vmul.f32 %v516, %v421
    %520 = vrot.lane.b32.xlu0 %v517, 64
    %v521 = vpop.permute.xlu0 %520
    %v523 = vmul.f32 %v516, %v521
    %525 = vrot.lane.b32.xlu0 %v523, 32
    %v526 = vpop.permute.xlu0 %525
    %v528 = vadd.f32 %v518, %v526
    %v529 = vtanh.pop %v528
    %531 = vrot.lane.b32.xlu0 %v529, 64
    %v532 = vpop.permute.xlu0 %531
    %v534 = vmul.f32 %v516, %v532
    %v537 = vunpack.c.l.s4 1983009808
    %v538 = vunpack.c.0.s8 %v537
    %v539 = vlaneseq
    %v540 = vshrl.u32 %v539, 7
    %v541 = vsub.s32 %v538, %v540
    %v542 = vrot.slane %v534, %v541
    %543 = vrot.lane.b32.xlu0 %v542, 32
    %v544 = vpop.permute.xlu0 %543
    %v545 = vsel %vm121, %v544, 0
    %547 = vmatprep.subr.mxu0 0.0
    %548 = vmatpush1.msra.mxu0 %v41
    %549 = vmatprep.subr.mxu0 0.0
    %550 = vmatpush1.msra.mxu0 %v42
    %551 = vmatprep.subr.mxu0 0.0
    %552 = vmatpush1.msra.mxu0 %v43
    %553 = vmatprep.subr.mxu0 0.0
    %554 = vmatpush1.msra.mxu0 %v44
    %555 = vmatprep.subr.mxu0 0.0
    %556 = vmatpush1.msra.mxu0 0.0
    %557 = vmatprep.subr.mxu0 0.0
    %558 = vmatpush1.msra.mxu0 0.0
    %559 = vmatprep.subr.mxu0 0.0
    %560 = vmatpush1.msra.mxu0 0.0
    %561 = vmatprep.subr.mxu0 0.0
    %562 = vmatpush1.msra.mxu0 0.0
    %563 = vmatprep.subr.mxu0 0.0
    %564 = vmatpush1.msra.mxu0 0.0
    %565 = vmatprep.subr.mxu0 0.0
    %566 = vmatpush1.msra.mxu0 0.0
    %567 = vmatprep.subr.mxu0 0.0
    %568 = vmatpush1.msra.mxu0 0.0
    %569 = vmatprep.subr.mxu0 0.0
    %570 = vmatpush1.msra.mxu0 0.0
    %571 = vmatprep.subr.mxu0 0.0
    %572 = vmatpush1.msra.mxu0 0.0
    %573 = vmatprep.subr.mxu0 0.0
    %574 = vmatpush1.msra.mxu0 0.0
    %575 = vmatprep.subr.mxu0 0.0
    %576 = vmatpush1.msra.mxu0 0.0
    %577 = vmatprep.subr.mxu0 0.0
    %578 = vmatpush1.msra.mxu0 0.0
    %579 = vmatprep.subr.mxu0 0.0
    %580 = vmatpush1.msra.mxu0 0.0
    %581 = vmatprep.subr.mxu0 0.0
    %582 = vmatpush1.msra.mxu0 0.0
    %583 = vmatprep.subr.mxu0 0.0
    %584 = vmatpush1.msra.mxu0 0.0
    %585 = vmatprep.subr.mxu0 0.0
    %586 = vmatpush1.msra.mxu0 0.0
    %587 = vmatprep.subr.mxu0 0.0
    %588 = vmatpush1.msra.mxu0 0.0
    %589 = vmatprep.subr.mxu0 0.0
    %590 = vmatpush1.msra.mxu0 0.0
    %591 = vmatprep.subr.mxu0 0.0
    %592 = vmatpush1.msra.mxu0 0.0
    %593 = vmatprep.subr.mxu0 0.0
    %594 = vmatpush1.msra.mxu0 0.0
    %595 = vmatprep.subr.mxu0 0.0
    %596 = vmatpush1.msra.mxu0 0.0
    %597 = vmatprep.subr.mxu0 0.0
    %598 = vmatpush1.msra.mxu0 0.0
    %599 = vmatprep.subr.mxu0 0.0
    %600 = vmatpush1.msra.mxu0 0.0
    %601 = vmatprep.subr.mxu0 0.0
    %602 = vmatpush1.msra.mxu0 0.0
    %603 = vmatprep.subr.mxu0 0.0
    %604 = vmatpush1.msra.mxu0 0.0
    %605 = vmatprep.subr.mxu0 0.0
    %606 = vmatpush1.msra.mxu0 0.0
    %607 = vmatprep.subr.mxu0 0.0
    %608 = vmatpush1.msra.mxu0 0.0
    %609 = vmatprep.subr.mxu0 0.0
    %610 = vmatpush1.msra.mxu0 0.0
    %611 = vmatprep.mubr.f32.mxu0 0.0
    %612 = vmatmul.mubr.f32.gmra.mrb[0].mxu0 %v545
    %v613 = vpop.f32.mrb[0].mxu0
    %v614 = vadd.f32 0.0, %v613
    %v615 = vpop.f32.mrb[0].mxu0
    %616 = vdwg.mxu0
    %v617 = vadd.f32 %v184, %v614
    %v618 = vxor.u32 %v617, 2147483648
    %v619 = vmul.f32 %v618, 1.442695
    %v620 = vpow.pop %v619
    %v621 = vadd.f32 %v620, 1.0
    %v622 = vrcp.pop %v621
    %v623 = vmul.f32 1.0, %v622
    %v624 = vtanh.pop %v617
    %v625 = vmul.f32 %v623, %v528
    %627 = vrot.lane.b32.xlu0 %v624, 64
    %v628 = vpop.permute.xlu0 %627
    %v630 = vmul.f32 %v623, %v628
    %632 = vrot.lane.b32.xlu0 %v630, 32
    %v633 = vpop.permute.xlu0 %632
    %v635 = vadd.f32 %v625, %v633
    %v636 = vtanh.pop %v635
    %638 = vrot.lane.b32.xlu0 %v636, 64
    %v639 = vpop.permute.xlu0 %638
    %v641 = vmul.f32 %v623, %v639
    %v644 = vunpack.c.l.s4 1983009808
    %v645 = vunpack.c.0.s8 %v644
    %v646 = vlaneseq
    %v647 = vshrl.u32 %v646, 7
    %v648 = vsub.s32 %v645, %v647
    %v649 = vrot.slane %v641, %v648
    %650 = vrot.lane.b32.xlu0 %v649, 32
    %v651 = vpop.permute.xlu0 %650
    %v652 = vsel %vm121, %v651, 0
    %654 = vmatprep.subr.mxu0 0.0
    %655 = vmatpush1.msra.mxu0 %v41
    %656 = vmatprep.subr.mxu0 0.0
    %657 = vmatpush1.msra.mxu0 %v42
    %658 = vmatprep.subr.mxu0 0.0
    %659 = vmatpush1.msra.mxu0 %v43
    %660 = vmatprep.subr.mxu0 0.0
    %661 = vmatpush1.msra.mxu0 %v44
    %662 = vmatprep.subr.mxu0 0.0
    %663 = vmatpush1.msra.mxu0 0.0
    %664 = vmatprep.subr.mxu0 0.0
    %665 = vmatpush1.msra.mxu0 0.0
    %666 = vmatprep.subr.mxu0 0.0
    %667 = vmatpush1.msra.mxu0 0.0
    %668 = vmatprep.subr.mxu0 0.0
    %669 = vmatpush1.msra.mxu0 0.0
    %670 = vmatprep.subr.mxu0 0.0
    %671 = vmatpush1.msra.mxu0 0.0
    %672 = vmatprep.subr.mxu0 0.0
    %673 = vmatpush1.msra.mxu0 0.0
    %674 = vmatprep.subr.mxu0 0.0
    %675 = vmatpush1.msra.mxu0 0.0
    %676 = vmatprep.subr.mxu0 0.0
    %677 = vmatpush1.msra.mxu0 0.0
    %678 = vmatprep.subr.mxu0 0.0
    %679 = vmatpush1.msra.mxu0 0.0
    %680 = vmatprep.subr.mxu0 0.0
    %681 = vmatpush1.msra.mxu0 0.0
    %682 = vmatprep.subr.mxu0 0.0
    %683 = vmatpush1.msra.mxu0 0.0
    %684 = vmatprep.subr.mxu0 0.0
    %685 = vmatpush1.msra.mxu0 0.0
    %686 = vmatprep.subr.mxu0 0.0
    %687 = vmatpush1.msra.mxu0 0.0
    %688 = vmatprep.subr.mxu0 0.0
    %689 = vmatpush1.msra.mxu0 0.0
    %690 = vmatprep.subr.mxu0 0.0
    %691 = vmatpush1.msra.mxu0 0.0
    %692 = vmatprep.subr.mxu0 0.0
    %693 = vmatpush1.msra.mxu0 0.0
    %694 = vmatprep.subr.mxu0 0.0
    %695 = vmatpush1.msra.mxu0 0.0
    %696 = vmatprep.subr.mxu0 0.0
    %697 = vmatpush1.msra.mxu0 0.0
    %698 = vmatprep.subr.mxu0 0.0
    %699 = vmatpush1.msra.mxu0 0.0
    %700 = vmatprep.subr.mxu0 0.0
    %701 = vmatpush1.msra.mxu0 0.0
    %702 = vmatprep.subr.mxu0 0.0
    %703 = vmatpush1.msra.mxu0 0.0
    %704 = vmatprep.subr.mxu0 0.0
    %705 = vmatpush1.msra.mxu0 0.0
    %706 = vmatprep.subr.mxu0 0.0
    %707 = vmatpush1.msra.mxu0 0.0
    %708 = vmatprep.subr.mxu0 0.0
    %709 = vmatpush1.msra.mxu0 0.0
    %710 = vmatprep.subr.mxu0 0.0
    %711 = vmatpush1.msra.mxu0 0.0
    %712 = vmatprep.subr.mxu0 0.0
    %713 = vmatpush1.msra.mxu0 0.0
    %714 = vmatprep.subr.mxu0 0.0
    %715 = vmatpush1.msra.mxu0 0.0
    %716 = vmatprep.subr.mxu0 0.0
    %717 = vmatpush1.msra.mxu0 0.0
    %718 = vmatprep.mubr.f32.mxu0 0.0
    %719 = vmatmul.mubr.f32.gmra.mrb[0].mxu0 %v652
    %v720 = vpop.f32.mrb[0].mxu0
    %v721 = vadd.f32 0.0, %v720
    %v722 = vpop.f32.mrb[0].mxu0
    %723 = vdwg.mxu0
    %v724 = vadd.f32 %v192, %v721
    %v725 = vxor.u32 %v724, 2147483648
    %v726 = vmul.f32 %v725, 1.442695
    %v727 = vpow.pop %v726
    %v728 = vadd.f32 %v727, 1.0
    %v729 = vrcp.pop %v728
    %v730 = vmul.f32 1.0, %v729
    %v731 = vtanh.pop %v724
    %v732 = vmul.f32 %v730, %v635
    %734 = vrot.lane.b32.xlu0 %v731, 64
    %v735 = vpop.permute.xlu0 %734
    %v737 = vmul.f32 %v730, %v735
    %739 = vrot.lane.b32.xlu0 %v737, 32
    %v740 = vpop.permute.xlu0 %739
    %v742 = vadd.f32 %v732, %v740
    %v743 = vtanh.pop %v742
    %745 = vrot.lane.b32.xlu0 %v743, 64
    %v746 = vpop.permute.xlu0 %745
    %v748 = vmul.f32 %v730, %v746
    %v751 = vunpack.c.l.s4 1983009808
    %v752 = vunpack.c.0.s8 %v751
    %v753 = vlaneseq
    %v754 = vshrl.u32 %v753, 7
    %v755 = vsub.s32 %v752, %v754
    %v756 = vrot.slane %v748, %v755
    %757 = vrot.lane.b32.xlu0 %v756, 32
    %v758 = vpop.permute.xlu0 %757
    %v759 = vsel %vm121, %v758, 0
    %761 = vmatprep.subr.mxu0 0.0
    %762 = vmatpush1.msra.mxu0 %v41
    %763 = vmatprep.subr.mxu0 0.0
    %764 = vmatpush1.msra.mxu0 %v42
    %765 = vmatprep.subr.mxu0 0.0
    %766 = vmatpush1.msra.mxu0 %v43
    %767 = vmatprep.subr.mxu0 0.0
    %768 = vmatpush1.msra.mxu0 %v44
    %769 = vmatprep.subr.mxu0 0.0
    %770 = vmatpush1.msra.mxu0 0.0
    %771 = vmatprep.subr.mxu0 0.0
    %772 = vmatpush1.msra.mxu0 0.0
    %773 = vmatprep.subr.mxu0 0.0
    %774 = vmatpush1.msra.mxu0 0.0
    %775 = vmatprep.subr.mxu0 0.0
    %776 = vmatpush1.msra.mxu0 0.0
    %777 = vmatprep.subr.mxu0 0.0
    %778 = vmatpush1.msra.mxu0 0.0
    %779 = vmatprep.subr.mxu0 0.0
    %780 = vmatpush1.msra.mxu0 0.0
    %781 = vmatprep.subr.mxu0 0.0
    %782 = vmatpush1.msra.mxu0 0.0
    %783 = vmatprep.subr.mxu0 0.0
    %784 = vmatpush1.msra.mxu0 0.0
    %785 = vmatprep.subr.mxu0 0.0
    %786 = vmatpush1.msra.mxu0 0.0
    %787 = vmatprep.subr.mxu0 0.0
    %788 = vmatpush1.msra.mxu0 0.0
    %789 = vmatprep.subr.mxu0 0.0
    %790 = vmatpush1.msra.mxu0 0.0
    %791 = vmatprep.subr.mxu0 0.0
    %792 = vmatpush1.msra.mxu0 0.0
    %793 = vmatprep.subr.mxu0 0.0
    %794 = vmatpush1.msra.mxu0 0.0
    %795 = vmatprep.subr.mxu0 0.0
    %796 = vmatpush1.msra.mxu0 0.0
    %797 = vmatprep.subr.mxu0 0.0
    %798 = vmatpush1.msra.mxu0 0.0
    %799 = vmatprep.subr.mxu0 0.0
    %800 = vmatpush1.msra.mxu0 0.0
    %801 = vmatprep.subr.mxu0 0.0
    %802 = vmatpush1.msra.mxu0 0.0
    %803 = vmatprep.subr.mxu0 0.0
    %804 = vmatpush1.msra.mxu0 0.0
    %805 = vmatprep.subr.mxu0 0.0
    %806 = vmatpush1.msra.mxu0 0.0
    %807 = vmatprep.subr.mxu0 0.0
    %808 = vmatpush1.msra.mxu0 0.0
    %809 = vmatprep.subr.mxu0 0.0
    %810 = vmatpush1.msra.mxu0 0.0
    %811 = vmatprep.subr.mxu0 0.0
    %812 = vmatpush1.msra.mxu0 0.0
    %813 = vmatprep.subr.mxu0 0.0
    %814 = vmatpush1.msra.mxu0 0.0
    %815 = vmatprep.subr.mxu0 0.0
    %816 = vmatpush1.msra.mxu0 0.0
    %817 = vmatprep.subr.mxu0 0.0
    %818 = vmatpush1.msra.mxu0 0.0
    %819 = vmatprep.subr.mxu0 0.0
    %820 = vmatpush1.msra.mxu0 0.0
    %821 = vmatprep.subr.mxu0 0.0
    %822 = vmatpush1.msra.mxu0 0.0
    %823 = vmatprep.subr.mxu0 0.0
    %824 = vmatpush1.msra.mxu0 0.0
    %825 = vmatprep.mubr.f32.mxu0 0.0
    %826 = vmatmul.mubr.f32.gmra.mrb[0].mxu0 %v759
    %v827 = vpop.f32.mrb[0].mxu0
    %v828 = vadd.f32 0.0, %v827
    %v829 = vpop.f32.mrb[0].mxu0
    %830 = vdwg.mxu0
    %v831 = vadd.f32 %v200, %v828
    %v832 = vxor.u32 %v831, 2147483648
    %v833 = vmul.f32 %v832, 1.442695
    %v834 = vpow.pop %v833
    %v835 = vadd.f32 %v834, 1.0
    %v836 = vrcp.pop %v835
    %v837 = vmul.f32 1.0, %v836
    %v838 = vtanh.pop %v831
    %v839 = vmul.f32 %v837, %v742
    %841 = vrot.lane.b32.xlu0 %v838, 64
    %v842 = vpop.permute.xlu0 %841
    %v844 = vmul.f32 %v837, %v842
    %846 = vrot.lane.b32.xlu0 %v844, 32
    %v847 = vpop.permute.xlu0 %846
    %v849 = vadd.f32 %v839, %v847
    %v850 = vtanh.pop %v849
    %852 = vrot.lane.b32.xlu0 %v850, 64
    %v853 = vpop.permute.xlu0 %852
    %v855 = vmul.f32 %v837, %v853
    %v858 = vunpack.c.l.s4 1983009808
    %v859 = vunpack.c.0.s8 %v858
    %v860 = vlaneseq
    %v861 = vshrl.u32 %v860, 7
    %v862 = vsub.s32 %v859, %v861
    %v863 = vrot.slane %v855, %v862
    %864 = vrot.lane.b32.xlu0 %v863, 32
    %v865 = vpop.permute.xlu0 %864
    %v866 = vsel %vm121, %v865, 0
    %868 = vmatprep.subr.mxu0 0.0
    %869 = vmatpush1.msra.mxu0 %v41
    %870 = vmatprep.subr.mxu0 0.0
    %871 = vmatpush1.msra.mxu0 %v42
    %872 = vmatprep.subr.mxu0 0.0
    %873 = vmatpush1.msra.mxu0 %v43
    %874 = vmatprep.subr.mxu0 0.0
    %875 = vmatpush1.msra.mxu0 %v44
    %876 = vmatprep.subr.mxu0 0.0
    %877 = vmatpush1.msra.mxu0 0.0
    %878 = vmatprep.subr.mxu0 0.0
    %879 = vmatpush1.msra.mxu0 0.0
    %880 = vmatprep.subr.mxu0 0.0
    %881 = vmatpush1.msra.mxu0 0.0
    %882 = vmatprep.subr.mxu0 0.0
    %883 = vmatpush1.msra.mxu0 0.0
    %884 = vmatprep.subr.mxu0 0.0
    %885 = vmatpush1.msra.mxu0 0.0
    %886 = vmatprep.subr.mxu0 0.0
    %887 = vmatpush1.msra.mxu0 0.0
    %888 = vmatprep.subr.mxu0 0.0
    %889 = vmatpush1.msra.mxu0 0.0
    %890 = vmatprep.subr.mxu0 0.0
    %891 = vmatpush1.msra.mxu0 0.0
    %892 = vmatprep.subr.mxu0 0.0
    %893 = vmatpush1.msra.mxu0 0.0
    %894 = vmatprep.subr.mxu0 0.0
    %895 = vmatpush1.msra.mxu0 0.0
    %896 = vmatprep.subr.mxu0 0.0
    %897 = vmatpush1.msra.mxu0 0.0
    %898 = vmatprep.subr.mxu0 0.0
    %899 = vmatpush1.msra.mxu0 0.0
    %900 = vmatprep.subr.mxu0 0.0
    %901 = vmatpush1.msra.mxu0 0.0
    %902 = vmatprep.subr.mxu0 0.0
    %903 = vmatpush1.msra.mxu0 0.0
    %904 = vmatprep.subr.mxu0 0.0
    %905 = vmatpush1.msra.mxu0 0.0
    %906 = vmatprep.subr.mxu0 0.0
    %907 = vmatpush1.msra.mxu0 0.0
    %908 = vmatprep.subr.mxu0 0.0
    %909 = vmatpush1.msra.mxu0 0.0
    %910 = vmatprep.subr.mxu0 0.0
    %911 = vmatpush1.msra.mxu0 0.0
    %912 = vmatprep.subr.mxu0 0.0
    %913 = vmatpush1.msra.mxu0 0.0
    %914 = vmatprep.subr.mxu0 0.0
    %915 = vmatpush1.msra.mxu0 0.0
    %916 = vmatprep.subr.mxu0 0.0
    %917 = vmatpush1.msra.mxu0 0.0
    %918 = vmatprep.subr.mxu0 0.0
    %919 = vmatpush1.msra.mxu0 0.0
    %920 = vmatprep.subr.mxu0 0.0
    %921 = vmatpush1.msra.mxu0 0.0
    %922 = vmatprep.subr.mxu0 0.0
    %923 = vmatpush1.msra.mxu0 0.0
    %924 = vmatprep.subr.mxu0 0.0
    %925 = vmatpush1.msra.mxu0 0.0
    %926 = vmatprep.subr.mxu0 0.0
    %927 = vmatpush1.msra.mxu0 0.0
    %928 = vmatprep.subr.mxu0 0.0
    %929 = vmatpush1.msra.mxu0 0.0
    %930 = vmatprep.subr.mxu0 0.0
    %931 = vmatpush1.msra.mxu0 0.0
    %932 = vmatprep.mubr.f32.mxu0 0.0
    %933 = vmatmul.mubr.f32.gmra.mrb[0].mxu0 %v866
    %v934 = vpop.f32.mrb[0].mxu0
    %v935 = vadd.f32 0.0, %v934
    %v936 = vpop.f32.mrb[0].mxu0
    %937 = vdwg.mxu0
    %v938 = vadd.f32 %v199, %v935
    %v939 = vxor.u32 %v938, 2147483648
    %v940 = vmul.f32 %v939, 1.442695
    %v941 = vpow.pop %v940
    %v942 = vadd.f32 %v941, 1.0
    %v943 = vrcp.pop %v942
    %v944 = vmul.f32 1.0, %v943
    %v945 = vtanh.pop %v938
    %v946 = vmul.f32 %v944, %v849
    %948 = vrot.lane.b32.xlu0 %v945, 64
    %v949 = vpop.permute.xlu0 %948
    %v951 = vmul.f32 %v944, %v949
    %953 = vrot.lane.b32.xlu0 %v951, 32
    %v954 = vpop.permute.xlu0 %953
    %v956 = vadd.f32 %v946, %v954
    %v957 = vtanh.pop %v956
    %959 = vrot.lane.b32.xlu0 %v957, 64
    %v960 = vpop.permute.xlu0 %959
    %v962 = vmul.f32 %v944, %v960
    %v965 = vunpack.c.l.s4 1983009808
    %v966 = vunpack.c.0.s8 %v965
    %v967 = vlaneseq
    %v968 = vshrl.u32 %v967, 7
    %v969 = vsub.s32 %v966, %v968
    %v970 = vrot.slane %v962, %v969
    %971 = vrot.lane.b32.xlu0 %v970, 32
    %v972 = vpop.permute.xlu0 %971
    %v973 = vsel %vm121, %v972, 0
    %975 = vmatprep.subr.mxu0 0.0
    %976 = vmatpush1.msra.mxu0 %v41
    %977 = vmatprep.subr.mxu0 0.0
    %978 = vmatpush1.msra.mxu0 %v42
    %979 = vmatprep.subr.mxu0 0.0
    %980 = vmatpush1.msra.mxu0 %v43
    %981 = vmatprep.subr.mxu0 0.0
    %982 = vmatpush1.msra.mxu0 %v44
    %983 = vmatprep.subr.mxu0 0.0
    %984 = vmatpush1.msra.mxu0 0.0
    %985 = vmatprep.subr.mxu0 0.0
    %986 = vmatpush1.msra.mxu0 0.0
    %987 = vmatprep.subr.mxu0 0.0
    %988 = vmatpush1.msra.mxu0 0.0
    %989 = vmatprep.subr.mxu0 0.0
    %990 = vmatpush1.msra.mxu0 0.0
    %991 = vmatprep.subr.mxu0 0.0
    %992 = vmatpush1.msra.mxu0 0.0
    %993 = vmatprep.subr.mxu0 0.0
    %994 = vmatpush1.msra.mxu0 0.0
    %995 = vmatprep.subr.mxu0 0.0
    %996 = vmatpush1.msra.mxu0 0.0
    %997 = vmatprep.subr.mxu0 0.0
    %998 = vmatpush1.msra.mxu0 0.0
    %999 = vmatprep.subr.mxu0 0.0
    %1000 = vmatpush1.msra.mxu0 0.0
    %1001 = vmatprep.subr.mxu0 0.0
    %1002 = vmatpush1.msra.mxu0 0.0
    %1003 = vmatprep.subr.mxu0 0.0
    %1004 = vmatpush1.msra.mxu0 0.0
    %1005 = vmatprep.subr.mxu0 0.0
    %1006 = vmatpush1.msra.mxu0 0.0
    %1007 = vmatprep.subr.mxu0 0.0
    %1008 = vmatpush1.msra.mxu0 0.0
    %1009 = vmatprep.subr.mxu0 0.0
    %1010 = vmatpush1.msra.mxu0 0.0
    %1011 = vmatprep.subr.mxu0 0.0
    %1012 = vmatpush1.msra.mxu0 0.0
    %1013 = vmatprep.subr.mxu0 0.0
    %1014 = vmatpush1.msra.mxu0 0.0
    %1015 = vmatprep.subr.mxu0 0.0
    %1016 = vmatpush1.msra.mxu0 0.0
    %1017 = vmatprep.subr.mxu0 0.0
    %1018 = vmatpush1.msra.mxu0 0.0
    %1019 = vmatprep.subr.mxu0 0.0
    %1020 = vmatpush1.msra.mxu0 0.0
    %1021 = vmatprep.subr.mxu0 0.0
    %1022 = vmatpush1.msra.mxu0 0.0
    %1023 = vmatprep.subr.mxu0 0.0
    %1024 = vmatpush1.msra.mxu0 0.0
    %1025 = vmatprep.subr.mxu0 0.0
    %1026 = vmatpush1.msra.mxu0 0.0
    %1027 = vmatprep.subr.mxu0 0.0
    %1028 = vmatpush1.msra.mxu0 0.0
    %1029 = vmatprep.subr.mxu0 0.0
    %1030 = vmatpush1.msra.mxu0 0.0
    %1031 = vmatprep.subr.mxu0 0.0
    %1032 = vmatpush1.msra.mxu0 0.0
    %1033 = vmatprep.subr.mxu0 0.0
    %1034 = vmatpush1.msra.mxu0 0.0
    %1035 = vmatprep.subr.mxu0 0.0
    %1036 = vmatpush1.msra.mxu0 0.0
    %1037 = vmatprep.subr.mxu0 0.0
    %1038 = vmatpush1.msra.mxu0 0.0
    %1039 = vmatprep.mubr.f32.mxu0 0.0
    %1040 = vmatmul.mubr.f32.gmra.mrb[0].mxu0 %v973
    %v1041 = vpop.f32.mrb[0].mxu0
    %v1042 = vadd.f32 0.0, %v1041
    %v1043 = vpop.f32.mrb[0].mxu0
    %1044 = vdwg.mxu0
    %v1045 = vadd.f32 %v201, %v1042
    %v1046 = vxor.u32 %v1045, 2147483648
    %v1047 = vmul.f32 %v1046, 1.442695
    %v1048 = vpow.pop %v1047
    %v1049 = vadd.f32 %v1048, 1.0
    %v1050 = vrcp.pop %v1049
    %v1051 = vmul.f32 1.0, %v1050
    %v1052 = vtanh.pop %v1045
    %v1053 = vmul.f32 %v1051, %v956
    %1055 = vrot.lane.b32.xlu0 %v1052, 64
    %v1056 = vpop.permute.xlu0 %1055
    %v1058 = vmul.f32 %v1051, %v1056
    %1060 = vrot.lane.b32.xlu0 %v1058, 32
    %v1061 = vpop.permute.xlu0 %1060
    %v1063 = vadd.f32 %v1053, %v1061
    %v1064 = vtanh.pop %v1063
    %1066 = vrot.lane.b32.xlu0 %v1064, 64
    %v1067 = vpop.permute.xlu0 %1066
    %v1069 = vmul.f32 %v1051, %v1067
    %1071 = vrot.lane.b32.xlu0 %v435, 64
    %v1072 = vpop.permute.xlu0 %1071
    %1074 = vrot.lane.b32.xlu0 %v542, 96
    %v1075 = vpop.permute.xlu0 %1074
    %1078 = vrot.lane.b32.xlu0 %v863, 64
    %v1079 = vpop.permute.xlu0 %1078
    %1081 = vrot.lane.b32.xlu0 %v970, 96
    %v1082 = vpop.permute.xlu0 %1081
    %v1084 = vsel %vm121, %v330, %v1072
    %vm1085 = vcmask 523264
    %v1086 = vsel %vm1085, %v1084, %v1075
    %vm1087 = vcmask 785408
    %v1088 = vsel %vm1087, %v1086, %v641
    %v1089 = vsel %vm121, %v758, %v1079
    %v1090 = vsel %vm1085, %v1089, %v1082
    %v1091 = vsel %vm1087, %v1090, %v1069
    %v1094 = vcombine.low %v1088, %v1091
    %v1096 = vunpack.c.l.s4 1983009808
    %v1097 = vunpack.c.0.s8 %v1096
    %v1098 = vlaneseq
    %v1099 = vshrl.u32 %v1098, 7
    %v1100 = vsub.s32 %v1097, %v1099
    %v1101 = vrot.slane %v1094, %v1100
    %1103 = vst [vmem:[%s6] sm:$0xf] %v1101
    %v1106 = vunpack.c.l.s4 1983009808
    %v1107 = vunpack.c.0.s8 %v1106
    %v1108 = vlaneseq
    %v1109 = vshrl.u32 %v1108, 7
    %v1110 = vsub.s32 %v1107, %v1109
    %v1111 = vrot.slane %v1063, %v1110
    %1112 = vrot.lane.b32.xlu0 %v1111, 96
    %v1113 = vpop.permute.xlu0 %1112
    %vm1115 = vcmask 254976
    %1116 = vst.msk [vmem:[#allocation5] sm:$0x3] %vm1115, %v1113
    // Predicated region
    $region30: #{lstm_layer_forward.1} parent=1 // pred_check
      _
    $region31: #{lstm_layer_forward.1} parent=1 // pred_check_branch
      %1118 = sbr.rel (0) target = $region33
    $region32: #{lstm_layer_forward.1} parent=1 // pred_region
      _
    $region33: #{lstm_layer_forward.1} parent=1 // pred_fallthru
      _
    // Predicated region
    $region34: #{lstm_layer_forward.1} parent=1 // pred_check
      _
    $region35: #{lstm_layer_forward.1} parent=1 // pred_check_branch
      %1120 = sbr.rel (0) target = $region37
    $region36: #{lstm_layer_forward.1} parent=1 // pred_region
      %s1122 = ssub.s32 32, 32
      %1123 = vsyncadd [#allocation4], %s1122
      %s1125 = sshll.u32 [#allocation5], 4
      %s1126 = int_to_ptr.vmem [resolvable:$true] %s1125
      %1128 = dma.vmem_to_hbm [thread:$0]  %s1126, 32, %s7, [#allocation4]
    $region37: #{lstm_layer_forward.1} parent=1 // pred_fallthru
      _
    // Predicated region
    $region38: #{lstm_layer_forward.1} parent=1 // pred_check
      _
    $region39: #{lstm_layer_forward.1} parent=1 // pred_check_branch
      %1130 = sbr.rel (0) target = $region41
    $region40: #{lstm_layer_forward.1} parent=1 // pred_region
      _
    $region41: #{lstm_layer_forward.1} parent=1 // pred_fallthru
      _
    // Predicated region
    $region42: #{lstm_layer_forward.1} parent=1 // pred_check
      _
    $region43: #{lstm_layer_forward.1} parent=1 // pred_check_branch
      %1132 = sbr.rel (0) target = $region45
    $region44: #{lstm_layer_forward.1} parent=1 // pred_region
      %1133 = dma.done [#allocation4], 32
    $region45: #{lstm_layer_forward.1} parent=1 // pred_fallthru
      _
    %1134 = vsyncpa [#allocation3], 1
    %1135 = vsyncpa [#allocation4], 1

</llo_original>
